<compile_context>
chip_gen: v7x
topology: tpu7x:2x2x1
jax: 0.10.0
libtpu: 0.0.40
codegen_flags: <defaults>
</compile_context>

<pallas_src>
import numpy as np
import jax
import jax.numpy as jnp
from jax.experimental import pallas as pl
from jax.experimental.pallas import tpu as pltpu


# ---------------------------------------------------------------------------
# Fused kernel: all layers + all heads + scaled head-sum + softsign, one launch.
# ---------------------------------------------------------------------------
def _elu(y):
    # ELU(alpha=1). exp() rides the EUP slot; select on the VPU.
    return jnp.where(y > 0.0, y, jnp.exp(y) - 1.0)


def make_fused_kernel(n_layers):
    def kernel(x_ref, *rest):
        # rest = (w_1, b_1, ..., w_L, b_L, s_a, s_b, out)
        sa_ref = rest[2 * n_layers]
        sb_ref = rest[2 * n_layers + 1]
        o_ref = rest[2 * n_layers + 2]

        y = x_ref[...]
        for c in range(n_layers):                      # trace-time unrolled (n_layers=2)
            w = rest[2 * c][...]
            b = rest[2 * c + 1][...]
            y = _elu(jnp.dot(y, w, preferred_element_type=jnp.float32) + b)

        # Head-sum * scale_out * a_softsign / b_softsign folded into two small matmuls
        # (applied after the final ELU, exactly as the reference does).
        num = jnp.dot(y, sa_ref[...], preferred_element_type=jnp.float32)   # a * acc
        den = jnp.dot(y, sb_ref[...], preferred_element_type=jnp.float32)   # b * acc
        o_ref[...] = num / (1.0 + jnp.abs(den))

    return kernel


# ---------------------------------------------------------------------------
# ConvTranspose1d as a dense (C_in*L_in, C_out*L_out) matrix.
# y[n, co, lo] = bias[co] + sum_{ci, li, k : lo = li*stride - pad + k} x[n, ci, li]*W[ci, co, k]
# Runs ONCE at init (hoisted out of the forward path).
# ---------------------------------------------------------------------------
def deconv_to_matrix(w, bias, l_in, stride, padding):
    # Assumes output_padding=0, dilation=1, groups=1 (matches the reference module).
    c_in, c_out, k = w.shape
    l_out = (l_in - 1) * stride - 2 * padding + k
    assert l_out > 0, "invalid deconv geometry"
    li = jnp.arange(l_in)
    lo = jnp.arange(l_out)
    kk = lo[None, :] - li[:, None] * stride + padding            # (l_in, l_out)
    valid = ((kk >= 0) & (kk < k)).astype(w.dtype)
    kk = jnp.clip(kk, 0, k - 1)
    m = w[:, :, kk] * valid[None, None, :, :]                    # (c_in, c_out, l_in, l_out)
    m = jnp.transpose(m, (0, 2, 1, 3)).reshape(c_in * l_in, c_out * l_out)
    b_flat = jnp.repeat(bias, l_out)                             # (c_out * l_out,)
    return m, b_flat, l_out


def _block_diag(mats):
    rows = sum(m.shape[0] for m in mats)
    cols = sum(m.shape[1] for m in mats)
    out = jnp.zeros((rows, cols), mats[0].dtype)
    r = c = 0
    for m in mats:
        out = out.at[r:r + m.shape[0], c:c + m.shape[1]].set(m)
        r += m.shape[0]
        c += m.shape[1]
    return out


def prepare_fused_params(heads, stride_up, padding_in, l0, a_soft, b_soft):
    """Precompute all dense layer matrices once; returns kernel-ready operands."""
    n_heads = len(heads)
    n_conv = len(heads[0]["layers"])

    per_layer = []                                   # per_layer[c][h] = (m, b_flat)
    l_in = l0
    for c in range(n_conv):
        cur = []
        for h in range(n_heads):
            w, b = heads[h]["layers"][c]
            m, b_flat, l_out = deconv_to_matrix(w, b, l_in, stride_up, padding_in[c])
            cur.append((m, b_flat))
        per_layer.append(cur)
        l_in = l_out
    l_final = l_in

    layers = []
    # Layer 1: all heads share the input -> concatenate along the output dim.
    m1 = jnp.concatenate([m for m, _ in per_layer[0]], axis=1)                 # (F0, H*F1)
    b1 = jnp.concatenate([b for _, b in per_layer[0]], axis=0).reshape(1, -1)  # (1, H*F1)
    layers.append((m1, b1))
    # Layers >= 2: block-diagonal over heads -> single MXU matmul per layer.
    for c in range(1, n_conv):
        w_bd = _block_diag([m for m, _ in per_layer[c]])                       # (H*Fin, H*Fout)
        b_bd = jnp.concatenate([b for _, b in per_layer[c]], axis=0).reshape(1, -1)
        layers.append((w_bd, b_bd))

    # Head-sum with scale_out, with a_softsign / b_softsign folded in (post-ELU => legal).
    eye = jnp.eye(l_final, dtype=jnp.float32)
    s_sum = jnp.concatenate(
        [heads[h]["scale_out"].astype(jnp.float32) * eye for h in range(n_heads)], axis=0)
    s_a = (a_soft.astype(jnp.float32) * s_sum)       # (H*L_final, L_final)
    s_b = (b_soft.astype(jnp.float32) * s_sum)
    return layers, s_a, s_b, l_final


# ---------------------------------------------------------------------------
# Deterministic parameter init (mirrors shapes in MCNN_net.__init__)
# ---------------------------------------------------------------------------
def init_params(key, n_conv, chan_down, width_up, n_heads):
    heads = []
    for _ in range(n_heads):
        layers = []
        for c in range(n_conv):
            key, kw, kb = jax.random.split(key, 3)
            c_in, c_out, k = chan_down[c], chan_down[c + 1], width_up[c]
            fan_in, fan_out = c_out * k, c_in * k
            bound = (6.0 / (fan_in + fan_out)) ** 0.5            # xavier_uniform
            w = jax.random.uniform(kw, (c_in, c_out, k), jnp.float32, -bound, bound)
            b_bound = 1.0 / (fan_in ** 0.5)
            b = jax.random.uniform(kb, (c_out,), jnp.float32, -b_bound, b_bound)
            layers.append((w, b))
        heads.append({"layers": layers, "scale_out": jnp.float32(1.0)})
    a_softsign = jnp.float32(1.0)
    b_softsign = jnp.float32(2.0)
    return heads, a_softsign, b_softsign


# ---------------------------------------------------------------------------
# MCNN_net.forward — a single fused pallas_call with a batch grid.
# ---------------------------------------------------------------------------
def _round_up(x, m):
    return (x + m - 1) // m * m


def mcnn_forward(mb_mag, fused_params, tile_n=256):
    layers, s_a, s_b, l_final = fused_params
    n, c0, l0 = mb_mag.shape
    f0 = c0 * l0
    n_layers = len(layers)

    x = mb_mag.reshape(n, f0).astype(jnp.float32)        # flatten (C, L) row-major
    tile_n = max(8, min(tile_n, _round_up(n, 8)))        # fill MXU rows when batch allows
    n_pad = _round_up(n, tile_n)
    if n_pad != n:
        x = jnp.pad(x, ((0, n_pad - n), (0, 0)))
    grid = (n_pad // tile_n,)

    # Batch-tiled input; weights map every grid step to block (0,0) -> DMA'd once,
    # resident in VMEM across the whole grid.
    in_specs = [pl.BlockSpec((tile_n, f0), lambda i: (i, 0))]
    operands = [x]
    for w, b in layers:
        in_specs.append(pl.BlockSpec(w.shape, lambda i: (0, 0)))
        in_specs.append(pl.BlockSpec(b.shape, lambda i: (0, 0)))
        operands += [w, b]
    in_specs.append(pl.BlockSpec(s_a.shape, lambda i: (0, 0)))
    in_specs.append(pl.BlockSpec(s_b.shape, lambda i: (0, 0)))
    operands += [s_a, s_b]

    out_spec = pl.BlockSpec((tile_n, l_final), lambda i: (i, 0))

    # Advisory cost estimate so XLA can overlap this small call with surrounding HLO.
    flops = 2 * n_pad * (sum(w.shape[0] * w.shape[1] for w, _ in layers)
                         + s_a.shape[0] * s_a.shape[1] + s_b.shape[0] * s_b.shape[1])
    transcendentals = n_pad * sum(w.shape[1] for w, _ in layers)          # exp in each ELU
    bytes_accessed = 4 * (x.size + sum(w.size + b.size for w, b in layers)
                          + s_a.size + s_b.size + n_pad * l_final)

    out = pl.pallas_call(
        make_fused_kernel(n_layers),
        out_shape=jax.ShapeDtypeStruct((n_pad, l_final), jnp.float32),
        grid=grid,
        in_specs=in_specs,
        out_specs=out_spec,
        compiler_params=pltpu.CompilerParams(
            dimension_semantics=("parallel",)),       # shard batch over v7x's 2 TCs
        cost_estimate=pl.CostEstimate(
            flops=flops, transcendentals=transcendentals, bytes_accessed=bytes_accessed),
    )(*operands)
    return out[:n]


# ---------------------------------------------------------------------------
# Pure numpy (float64) reference for validation: direct ConvTranspose1d loops.
# ---------------------------------------------------------------------------
def ref_forward_np(x, heads, a_soft, b_soft, stride, padding_in):
    x = np.asarray(x, np.float64)
    total = None
    for head in heads:
        h = x.copy()
        for (w, bias), pad in zip(head["layers"], padding_in):
            w = np.asarray(w, np.float64)
            bias = np.asarray(bias, np.float64)
            c_in, c_out, k = w.shape
            n, _, l_in = h.shape
            l_out = (l_in - 1) * stride - 2 * pad + k
            y = np.zeros((n, c_out, l_out), np.float64)
            for li in range(l_in):
                for kk in range(k):
                    lo = li * stride - pad + kk
                    if 0 <= lo < l_out:
                        y[:, :, lo] += np.einsum("ni,io->no", h[:, :, li], w[:, :, kk])
            y += bias[None, :, None]
            h = np.where(y > 0, y, np.expm1(y))                  # ELU
        out_h = h[:, 0, :] * float(head["scale_out"])            # squeeze(1) * scale_out
        total = out_h if total is None else total + out_h
    a = float(a_soft)
    b = float(b_soft)
    return total * a / (1.0 + np.abs(total * b))


if __name__ == "__main__":
    # Module hyper-parameters (small, consistent with the forward pass).
    n_conv = 2
    chan_down = [4, 8, 1]      # last must be 1 (forward does x.squeeze(1))
    width_up = [4, 4]
    padding_in = [1, 1]
    stride_up = 2
    n_heads = 2
    bn = 0                     # TODO(synk): bn=1 path not implemented (see header).

    batch, seq_in = 2, 8       # mb_mag: (N, C_in, L) = (2, 4, 8)

    key = jax.random.PRNGKey(0)
    key, kx = jax.random.split(key)
    mb_mag = jax.random.normal(kx, (batch, chan_down[0], seq_in), jnp.float32)

    heads, a_soft, b_soft = init_params(key, n_conv, chan_down, width_up, n_heads)

    # Hoisted out of the forward path: dense deconv matrices + fused epilogue matrices.
    fused = prepare_fused_params(heads, stride_up, padding_in, seq_in, a_soft, b_soft)

    # L_out = ((8-1)*2 - 2 + 4 = 16) -> ((16-1)*2 - 2 + 4 = 32)
    out = jax.block_until_ready(mcnn_forward(mb_mag, fused))
    assert out.shape == (batch, 32), out.shape
    assert bool(np.all(np.isfinite(np.asarray(out))))
    ref = ref_forward_np(mb_mag, heads, a_soft, b_soft, stride_up, padding_in)
    assert float(np.max(np.abs(np.asarray(out, np.float64) - ref))) < 5e-2

    # Exercise the multi-step grid path: weights stay resident across grid steps.
    key, kx2 = jax.random.split(key)
    big = jax.random.normal(kx2, (40, chan_down[0], seq_in), jnp.float32)
    out_big = jax.block_until_ready(mcnn_forward(big, fused, tile_n=8))
    assert out_big.shape == (40, 32), out_big.shape
    ref_big = ref_forward_np(big, heads, a_soft, b_soft, stride_up, padding_in)
    assert float(np.max(np.abs(np.asarray(out_big, np.float64) - ref_big))) < 5e-2

    print("KERNEL_OK")
</pallas_src>

<mosaic_0001>
module attributes {stable_mosaic.version = 11 : i64} {
  func.func @kernel(%arg0: i32, %arg1: memref<8x32xf32, #tpu.memory_space<vmem>>, %arg2: memref<32x256xf32, #tpu.memory_space<vmem>>, %arg3: memref<1x256xf32, #tpu.memory_space<vmem>>, %arg4: memref<256x64xf32, #tpu.memory_space<vmem>>, %arg5: memref<1x64xf32, #tpu.memory_space<vmem>>, %arg6: memref<64x32xf32, #tpu.memory_space<vmem>>, %arg7: memref<64x32xf32, #tpu.memory_space<vmem>>, %arg8: memref<8x32xf32, #tpu.memory_space<vmem>>) attributes {dimension_semantics = [#tpu.dimension_semantics<parallel>], iteration_bounds = array<i64: 1>, scalar_prefetch = 0 : i64, scratch_operands = 0 : i64, tpu.core_type = #tpu.core_type<tc>, window_params = [{transform_indices = @transform_0, window_bounds = array<i64: 8, 32>}, {pipeline_mode = #tpu.pipeline_mode<synchronous>, transform_indices = @transform_1, window_bounds = array<i64: 32, 256>}, {pipeline_mode = #tpu.pipeline_mode<synchronous>, transform_indices = @transform_2, window_bounds = array<i64: 1, 256>}, {pipeline_mode = #tpu.pipeline_mode<synchronous>, transform_indices = @transform_3, window_bounds = array<i64: 256, 64>}, {pipeline_mode = #tpu.pipeline_mode<synchronous>, transform_indices = @transform_4, window_bounds = array<i64: 1, 64>}, {pipeline_mode = #tpu.pipeline_mode<synchronous>, transform_indices = @transform_5, window_bounds = array<i64: 64, 32>}, {pipeline_mode = #tpu.pipeline_mode<synchronous>, transform_indices = @transform_6, window_bounds = array<i64: 64, 32>}, {transform_indices = @transform_7, window_bounds = array<i64: 8, 32>}]} {
    %c0 = arith.constant 0 : index
    %c0_0 = arith.constant 0 : index
    %0 = vector.load %arg1[%c0, %c0_0] : memref<8x32xf32, #tpu.memory_space<vmem>>, vector<8x32xf32>
    %c0_1 = arith.constant 0 : index
    %c0_2 = arith.constant 0 : index
    %1 = vector.load %arg2[%c0_1, %c0_2] : memref<32x256xf32, #tpu.memory_space<vmem>>, vector<32x256xf32>
    %c0_3 = arith.constant 0 : index
    %c0_4 = arith.constant 0 : index
    %2 = vector.load %arg3[%c0_3, %c0_4] : memref<1x256xf32, #tpu.memory_space<vmem>>, vector<1x256xf32>
    %cst = arith.constant dense<0.000000e+00> : vector<8x256xf32>
    %3 = tpu.matmul %0, %1, %cst {dimension_numbers = #tpu.dot_dimension_numbers<[1], [0], [0], [1], [0, 0, 1, 1], [], []>} : vector<8x32xf32>, vector<32x256xf32>, vector<8x256xf32> -> vector<8x256xf32>
    %4 = vector.broadcast %2 : vector<1x256xf32> to vector<8x256xf32>
    %5 = arith.addf %3, %4 : vector<8x256xf32>
    %cst_5 = arith.constant 0.000000e+00 : f32
    %6 = vector.broadcast %cst_5 : f32 to vector<8x256xf32>
    %7 = arith.cmpf ogt, %5, %6 : vector<8x256xf32>
    %8 = math.exp %5 : vector<8x256xf32>
    %cst_6 = arith.constant 1.000000e+00 : f32
    %9 = vector.broadcast %cst_6 : f32 to vector<8x256xf32>
    %10 = arith.subf %8, %9 : vector<8x256xf32>
    %11 = arith.select %7, %5, %10 : vector<8x256xi1>, vector<8x256xf32>
    %c0_7 = arith.constant 0 : index
    %c0_8 = arith.constant 0 : index
    %12 = vector.load %arg4[%c0_7, %c0_8] : memref<256x64xf32, #tpu.memory_space<vmem>>, vector<256x64xf32>
    %c0_9 = arith.constant 0 : index
    %c0_10 = arith.constant 0 : index
    %13 = vector.load %arg5[%c0_9, %c0_10] : memref<1x64xf32, #tpu.memory_space<vmem>>, vector<1x64xf32>
    %cst_11 = arith.constant dense<0.000000e+00> : vector<8x64xf32>
    %14 = tpu.matmul %11, %12, %cst_11 {dimension_numbers = #tpu.dot_dimension_numbers<[1], [0], [0], [1], [0, 0, 1, 1], [], []>} : vector<8x256xf32>, vector<256x64xf32>, vector<8x64xf32> -> vector<8x64xf32>
    %15 = vector.broadcast %13 : vector<1x64xf32> to vector<8x64xf32>
    %16 = arith.addf %14, %15 : vector<8x64xf32>
    %cst_12 = arith.constant 0.000000e+00 : f32
    %17 = vector.broadcast %cst_12 : f32 to vector<8x64xf32>
    %18 = arith.cmpf ogt, %16, %17 : vector<8x64xf32>
    %19 = math.exp %16 : vector<8x64xf32>
    %cst_13 = arith.constant 1.000000e+00 : f32
    %20 = vector.broadcast %cst_13 : f32 to vector<8x64xf32>
    %21 = arith.subf %19, %20 : vector<8x64xf32>
    %22 = arith.select %18, %16, %21 : vector<8x64xi1>, vector<8x64xf32>
    %c0_14 = arith.constant 0 : index
    %c0_15 = arith.constant 0 : index
    %23 = vector.load %arg6[%c0_14, %c0_15] : memref<64x32xf32, #tpu.memory_space<vmem>>, vector<64x32xf32>
    %cst_16 = arith.constant dense<0.000000e+00> : vector<8x32xf32>
    %24 = tpu.matmul %22, %23, %cst_16 {dimension_numbers = #tpu.dot_dimension_numbers<[1], [0], [0], [1], [0, 0, 1, 1], [], []>} : vector<8x64xf32>, vector<64x32xf32>, vector<8x32xf32> -> vector<8x32xf32>
    %c0_17 = arith.constant 0 : index
    %c0_18 = arith.constant 0 : index
    %25 = vector.load %arg7[%c0_17, %c0_18] : memref<64x32xf32, #tpu.memory_space<vmem>>, vector<64x32xf32>
    %cst_19 = arith.constant dense<0.000000e+00> : vector<8x32xf32>
    %26 = tpu.matmul %22, %25, %cst_19 {dimension_numbers = #tpu.dot_dimension_numbers<[1], [0], [0], [1], [0, 0, 1, 1], [], []>} : vector<8x64xf32>, vector<64x32xf32>, vector<8x32xf32> -> vector<8x32xf32>
    %27 = math.absf %26 : vector<8x32xf32>
    %cst_20 = arith.constant 1.000000e+00 : f32
    %28 = vector.broadcast %cst_20 : f32 to vector<8x32xf32>
    %29 = arith.addf %28, %27 : vector<8x32xf32>
    %30 = arith.divf %24, %29 : vector<8x32xf32>
    %c0_21 = arith.constant 0 : index
    %c0_22 = arith.constant 0 : index
    %31 = vector.load %arg8[%c0_21, %c0_22] : memref<8x32xf32, #tpu.memory_space<vmem>>, vector<8x32xf32>
    tpu.vector_store %arg8[%c0_21, %c0_22], %30 {strides = array<i32>} : memref<8x32xf32, #tpu.memory_space<vmem>>, vector<8x32xf32>,
    return
  }
  func.func @transform_0(%arg0: i32) -> (i32, i32) {
    %c0_i32 = arith.constant 0 : i32
    %c0_i32_0 = arith.constant 0 : i32
    return %arg0, %c0_i32 : i32, i32
  }
  func.func @transform_1(%arg0: i32) -> (i32, i32) {
    %c0_i32 = arith.constant 0 : i32
    %c0_i32_0 = arith.constant 0 : i32
    %c0_i32_1 = arith.constant 0 : i32
    return %c0_i32, %c0_i32_0 : i32, i32
  }
  func.func @transform_2(%arg0: i32) -> (i32, i32) {
    %c0_i32 = arith.constant 0 : i32
    %c0_i32_0 = arith.constant 0 : i32
    %c0_i32_1 = arith.constant 0 : i32
    return %c0_i32, %c0_i32_0 : i32, i32
  }
  func.func @transform_3(%arg0: i32) -> (i32, i32) {
    %c0_i32 = arith.constant 0 : i32
    %c0_i32_0 = arith.constant 0 : i32
    %c0_i32_1 = arith.constant 0 : i32
    return %c0_i32, %c0_i32_0 : i32, i32
  }
  func.func @transform_4(%arg0: i32) -> (i32, i32) {
    %c0_i32 = arith.constant 0 : i32
    %c0_i32_0 = arith.constant 0 : i32
    %c0_i32_1 = arith.constant 0 : i32
    return %c0_i32, %c0_i32_0 : i32, i32
  }
  func.func @transform_5(%arg0: i32) -> (i32, i32) {
    %c0_i32 = arith.constant 0 : i32
    %c0_i32_0 = arith.constant 0 : i32
    %c0_i32_1 = arith.constant 0 : i32
    return %c0_i32, %c0_i32_0 : i32, i32
  }
  func.func @transform_6(%arg0: i32) -> (i32, i32) {
    %c0_i32 = arith.constant 0 : i32
    %c0_i32_0 = arith.constant 0 : i32
    %c0_i32_1 = arith.constant 0 : i32
    return %c0_i32, %c0_i32_0 : i32, i32
  }
  func.func @transform_7(%arg0: i32) -> (i32, i32) {
    %c0_i32 = arith.constant 0 : i32
    %c0_i32_0 = arith.constant 0 : i32
    return %arg0, %c0_i32 : i32, i32
  }
}

</mosaic_0001>

<llo_original>
// kernel: tpu_custom_call.1
$region0: #{tpu_custom_call.1}
  #allocation0 [shape = 'u32[]', space=smem, size = 0x4, offset = 0x4, fixed_abs, tag = 'smem constant byte address 0x4 - core index']
  #allocation1 [shape = 'u32[144,128]{1,0:T(1,128)}', space=vmem, size = 0x12000, scoped, tag = 'internal scratch']
  %s0 = inlined_call_operand.vmem [shape: f32[8,32], index: 0, kind: input, shape index: {}]
  %s1 = inlined_call_operand.vmem [shape: f32[32,256], index: 1, kind: input, shape index: {}]
  %s2 = inlined_call_operand.vmem [shape: f32[1,256], index: 2, kind: input, shape index: {}]
  %s3 = inlined_call_operand.vmem [shape: f32[256,64], index: 3, kind: input, shape index: {}]
  %s4 = inlined_call_operand.vmem [shape: f32[1,64], index: 4, kind: input, shape index: {}]
  %s5 = inlined_call_operand.vmem [shape: f32[64,32], index: 5, kind: input, shape index: {}]
  %s6 = inlined_call_operand.vmem [shape: f32[64,32], index: 6, kind: input, shape index: {}]
  %s7 = inlined_call_operand.hbm [shape: f32[8,32], index: 7, kind: output, shape index: {}]
  %s8 = sld [smem:[#allocation0]]
  $region38: #{tpu_custom_call.1} parent=0
    _
  %s10 = ssub.s32 1, %s8
  %s11 = scalar_select 0, %s10, %s8
  $region1: #{tpu_custom_call.1} parent=0
    #allocation2 [shape = 'u8[4096]{0}', space=vmem, size = 0x1000, scoped, tag = 'output window, operand 0, single buffered']
    #allocation3 [shape = 's32[1]{0}', space=sflag, size = 0x4, scoped, tag = 'scoped memory for tpu_custom_call.1']
    %12 = vsyncpa [#allocation3], 0
    // Predicated region
    $region2: #{tpu_custom_call.1} parent=1 // pred_check
      _
    $region3: #{tpu_custom_call.1} parent=1 // pred_check_branch
      %14 = sbr.rel (0) target = $region5
    $region4: #{tpu_custom_call.1} parent=1 // pred_region
      _
    $region5: #{tpu_custom_call.1} parent=1 // pred_fallthru
      _
    // Predicated region
    $region6: #{tpu_custom_call.1} parent=1 // pred_check
      _
    $region7: #{tpu_custom_call.1} parent=1 // pred_check_branch
      %16 = sbr.rel (0) target = $region9
    $region8: #{tpu_custom_call.1} parent=1 // pred_region
      _
    $region9: #{tpu_custom_call.1} parent=1 // pred_fallthru
      _
    // Predicated region
    $region10: #{tpu_custom_call.1} parent=1 // pred_check
      _
    $region11: #{tpu_custom_call.1} parent=1 // pred_check_branch
      %18 = sbr.rel (0) target = $region13
    $region12: #{tpu_custom_call.1} parent=1 // pred_region
      _
    $region13: #{tpu_custom_call.1} parent=1 // pred_fallthru
      _
    // Predicated region
    $region14: #{tpu_custom_call.1} parent=1 // pred_check
      _
    $region15: #{tpu_custom_call.1} parent=1 // pred_check_branch
      %20 = sbr.rel (0) target = $region17
    $region16: #{tpu_custom_call.1} parent=1 // pred_region
      _
    $region17: #{tpu_custom_call.1} parent=1 // pred_fallthru
      _
    // Predicated region
    $region18: #{tpu_custom_call.1} parent=1 // pred_check
      _
    $region19: #{tpu_custom_call.1} parent=1 // pred_check_branch
      %22 = sbr.rel (0) target = $region21
    $region20: #{tpu_custom_call.1} parent=1 // pred_region
      _
    $region21: #{tpu_custom_call.1} parent=1 // pred_fallthru
      _
    // Predicated region
    $region22: #{tpu_custom_call.1} parent=1 // pred_check
      _
    $region23: #{tpu_custom_call.1} parent=1 // pred_check_branch
      %24 = sbr.rel (0) target = $region25
    $region24: #{tpu_custom_call.1} parent=1 // pred_region
      _
    $region25: #{tpu_custom_call.1} parent=1 // pred_fallthru
      _
    // Predicated region
    $region26: #{tpu_custom_call.1} parent=1 // pred_check
      _
    $region27: #{tpu_custom_call.1} parent=1 // pred_check_branch
      %26 = sbr.rel (0) target = $region29
    $region28: #{tpu_custom_call.1} parent=1 // pred_region
      _
    $region29: #{tpu_custom_call.1} parent=1 // pred_fallthru
      _
    %v27 = vld [vmem:[%s0] sm:$0xff]
    %v28 = vld [vmem:[%s1] sm:$0xff]
    %v29 = vld [vmem:[%s1 + $0x8] sm:$0xff]
    %v30 = vld [vmem:[%s1 + $0x10] sm:$0xff]
    %v31 = vld [vmem:[%s1 + $0x18] sm:$0xff]
    %v32 = vld [vmem:[%s1 + $0x20] sm:$0xff]
    %v33 = vld [vmem:[%s1 + $0x28] sm:$0xff]
    %v34 = vld [vmem:[%s1 + $0x30] sm:$0xff]
    %v35 = vld [vmem:[%s1 + $0x38] sm:$0xff]
    %v36 = vld [vmem:[%s2] sm:$0x3]
    %v38 = vlaneseq
    %v39 = vshrl.u32 %v38, 7
    %v40 = vsub.s32 0, %v39
    %v41 = vrot.slane %v36, %v40
    %v42 = vlaneseq
    %v43 = vshrl.u32 %v42, 7
    %v44 = vsub.s32 1, %v43
    %v45 = vrot.slane %v36, %v44
    %vm48 = vcmask 261120
    %v50 = vsel %vm48, %v27, 0
    %52 = vmatprep.subr.mxu0 %v29
    %53 = vmatpush1.msra.mxu0 %v28
    %54 = vmatprep.subr.mxu0 %v31
    %55 = vmatpush1.msra.mxu0 %v30
    %56 = vmatprep.subr.mxu0 %v33
    %57 = vmatpush1.msra.mxu0 %v32
    %58 = vmatprep.subr.mxu0 %v35
    %59 = vmatpush1.msra.mxu0 %v34
    %60 = vmatprep.subr.mxu0 0.0
    %61 = vmatpush1.msra.mxu0 0.0
    %62 = vmatprep.subr.mxu0 0.0
    %63 = vmatpush1.msra.mxu0 0.0
    %64 = vmatprep.subr.mxu0 0.0
    %65 = vmatpush1.msra.mxu0 0.0
    %66 = vmatprep.subr.mxu0 0.0
    %67 = vmatpush1.msra.mxu0 0.0
    %68 = vmatprep.subr.mxu0 0.0
    %69 = vmatpush1.msra.mxu0 0.0
    %70 = vmatprep.subr.mxu0 0.0
    %71 = vmatpush1.msra.mxu0 0.0
    %72 = vmatprep.subr.mxu0 0.0
    %73 = vmatpush1.msra.mxu0 0.0
    %74 = vmatprep.subr.mxu0 0.0
    %75 = vmatpush1.msra.mxu0 0.0
    %76 = vmatprep.subr.mxu0 0.0
    %77 = vmatpush1.msra.mxu0 0.0
    %78 = vmatprep.subr.mxu0 0.0
    %79 = vmatpush1.msra.mxu0 0.0
    %80 = vmatprep.subr.mxu0 0.0
    %81 = vmatpush1.msra.mxu0 0.0
    %82 = vmatprep.subr.mxu0 0.0
    %83 = vmatpush1.msra.mxu0 0.0
    %84 = vmatprep.subr.mxu0 0.0
    %85 = vmatpush1.msra.mxu0 0.0
    %86 = vmatprep.subr.mxu0 0.0
    %87 = vmatpush1.msra.mxu0 0.0
    %88 = vmatprep.subr.mxu0 0.0
    %89 = vmatpush1.msra.mxu0 0.0
    %90 = vmatprep.subr.mxu0 0.0
    %91 = vmatpush1.msra.mxu0 0.0
    %92 = vmatprep.subr.mxu0 0.0
    %93 = vmatpush1.msra.mxu0 0.0
    %94 = vmatprep.subr.mxu0 0.0
    %95 = vmatpush1.msra.mxu0 0.0
    %96 = vmatprep.subr.mxu0 0.0
    %97 = vmatpush1.msra.mxu0 0.0
    %98 = vmatprep.subr.mxu0 0.0
    %99 = vmatpush1.msra.mxu0 0.0
    %100 = vmatprep.subr.mxu0 0.0
    %101 = vmatpush1.msra.mxu0 0.0
    %102 = vmatprep.subr.mxu0 0.0
    %103 = vmatpush1.msra.mxu0 0.0
    %104 = vmatprep.subr.mxu0 0.0
    %105 = vmatpush1.msra.mxu0 0.0
    %106 = vmatprep.subr.mxu0 0.0
    %107 = vmatpush1.msra.mxu0 0.0
    %108 = vmatprep.subr.mxu0 0.0
    %109 = vmatpush1.msra.mxu0 0.0
    %110 = vmatprep.subr.mxu0 0.0
    %111 = vmatpush1.msra.mxu0 0.0
    %112 = vmatprep.subr.mxu0 0.0
    %113 = vmatpush1.msra.mxu0 0.0
    %114 = vmatprep.subr.mxu0 0.0
    %115 = vmatpush1.msra.mxu0 0.0
    %116 = vmatprep.mubr.f32.mxu0 0.0
    %117 = vmatmul.mubr.f32.gmra.mrb[0].mxu0 %v50
    %v118 = vpop.f32.mrb[0].mxu0
    %v119 = vadd.f32 %v41, %v118
    %v120 = vpop.f32.mrb[0].mxu0
    %v121 = vadd.f32 %v45, %v120
    %122 = vdwg.mxu0
    %vm123 = vcmp.gt.f32.partialorder %v119, 0.0
    %vm124 = vcmp.gt.f32.partialorder %v121, 0.0
    %v125 = vmul.f32 %v119, 1.442695
    %v126 = vpow.pop %v125
    %v127 = vmul.f32 %v121, 1.442695
    %v128 = vpow.pop %v127
    %v129 = vsub.f32 %v126, 1.0
    %v130 = vsub.f32 %v128, 1.0
    %v131 = vsel %vm123, %v119, %v129
    %v132 = vsel %vm124, %v121, %v130
    %v133 = vld [vmem:[%s3] sm:$0xff]
    %v134 = vld [vmem:[%s3 + $0x8] sm:$0xff]
    %v135 = vld [vmem:[%s3 + $0x10] sm:$0xff]
    %v136 = vld [vmem:[%s3 + $0x18] sm:$0xff]
    %v137 = vld [vmem:[%s3 + $0x20] sm:$0xff]
    %v138 = vld [vmem:[%s3 + $0x28] sm:$0xff]
    %v139 = vld [vmem:[%s3 + $0x30] sm:$0xff]
    %v140 = vld [vmem:[%s3 + $0x38] sm:$0xff]
    %v141 = vld [vmem:[%s3 + $0x40] sm:$0xff]
    %v142 = vld [vmem:[%s3 + $0x48] sm:$0xff]
    %v143 = vld [vmem:[%s3 + $0x50] sm:$0xff]
    %v144 = vld [vmem:[%s3 + $0x58] sm:$0xff]
    %v145 = vld [vmem:[%s3 + $0x60] sm:$0xff]
    %v146 = vld [vmem:[%s3 + $0x68] sm:$0xff]
    %v147 = vld [vmem:[%s3 + $0x70] sm:$0xff]
    %v148 = vld [vmem:[%s3 + $0x78] sm:$0xff]
    %v149 = vld [vmem:[%s3 + $0x80] sm:$0xff]
    %v150 = vld [vmem:[%s3 + $0x88] sm:$0xff]
    %v151 = vld [vmem:[%s3 + $0x90] sm:$0xff]
    %v152 = vld [vmem:[%s3 + $0x98] sm:$0xff]
    %v153 = vld [vmem:[%s3 + $0xa0] sm:$0xff]
    %v154 = vld [vmem:[%s3 + $0xa8] sm:$0xff]
    %v155 = vld [vmem:[%s3 + $0xb0] sm:$0xff]
    %v156 = vld [vmem:[%s3 + $0xb8] sm:$0xff]
    %v157 = vld [vmem:[%s3 + $0xc0] sm:$0xff]
    %v158 = vld [vmem:[%s3 + $0xc8] sm:$0xff]
    %v159 = vld [vmem:[%s3 + $0xd0] sm:$0xff]
    %v160 = vld [vmem:[%s3 + $0xd8] sm:$0xff]
    %v161 = vld [vmem:[%s3 + $0xe0] sm:$0xff]
    %v162 = vld [vmem:[%s3 + $0xe8] sm:$0xff]
    %v163 = vld [vmem:[%s3 + $0xf0] sm:$0xff]
    %v164 = vld [vmem:[%s3 + $0xf8] sm:$0xff]
    %v165 = vld [vmem:[%s4] sm:$0x1]
    %v167 = vlaneseq
    %v168 = vshrl.u32 %v167, 7
    %v169 = vsub.s32 0, %v168
    %v170 = vrot.slane %v165, %v169
    %172 = vmatprep.subr.mxu0 0.0
    %173 = vmatpush1.msra.mxu0 %v133
    %174 = vmatprep.subr.mxu0 0.0
    %175 = vmatpush1.msra.mxu0 %v134
    %176 = vmatprep.subr.mxu0 0.0
    %177 = vmatpush1.msra.mxu0 %v135
    %178 = vmatprep.subr.mxu0 0.0
    %179 = vmatpush1.msra.mxu0 %v136
    %180 = vmatprep.subr.mxu0 0.0
    %181 = vmatpush1.msra.mxu0 %v137
    %182 = vmatprep.subr.mxu0 0.0
    %183 = vmatpush1.msra.mxu0 %v138
    %184 = vmatprep.subr.mxu0 0.0
    %185 = vmatpush1.msra.mxu0 %v139
    %186 = vmatprep.subr.mxu0 0.0
    %187 = vmatpush1.msra.mxu0 %v140
    %188 = vmatprep.subr.mxu0 0.0
    %189 = vmatpush1.msra.mxu0 %v141
    %190 = vmatprep.subr.mxu0 0.0
    %191 = vmatpush1.msra.mxu0 %v142
    %192 = vmatprep.subr.mxu0 0.0
    %193 = vmatpush1.msra.mxu0 %v143
    %194 = vmatprep.subr.mxu0 0.0
    %195 = vmatpush1.msra.mxu0 %v144
    %196 = vmatprep.subr.mxu0 0.0
    %197 = vmatpush1.msra.mxu0 %v145
    %198 = vmatprep.subr.mxu0 0.0
    %199 = vmatpush1.msra.mxu0 %v146
    %200 = vmatprep.subr.mxu0 0.0
    %201 = vmatpush1.msra.mxu0 %v147
    %202 = vmatprep.subr.mxu0 0.0
    %203 = vmatpush1.msra.mxu0 %v148
    %204 = vmatprep.subr.mxu0 0.0
    %205 = vmatpush1.msra.mxu0 %v149
    %206 = vmatprep.subr.mxu0 0.0
    %207 = vmatpush1.msra.mxu0 %v150
    %208 = vmatprep.subr.mxu0 0.0
    %209 = vmatpush1.msra.mxu0 %v151
    %210 = vmatprep.subr.mxu0 0.0
    %211 = vmatpush1.msra.mxu0 %v152
    %212 = vmatprep.subr.mxu0 0.0
    %213 = vmatpush1.msra.mxu0 %v153
    %214 = vmatprep.subr.mxu0 0.0
    %215 = vmatpush1.msra.mxu0 %v154
    %216 = vmatprep.subr.mxu0 0.0
    %217 = vmatpush1.msra.mxu0 %v155
    %218 = vmatprep.subr.mxu0 0.0
    %219 = vmatpush1.msra.mxu0 %v156
    %220 = vmatprep.subr.mxu0 0.0
    %221 = vmatpush1.msra.mxu0 %v157
    %222 = vmatprep.subr.mxu0 0.0
    %223 = vmatpush1.msra.mxu0 %v158
    %224 = vmatprep.subr.mxu0 0.0
    %225 = vmatpush1.msra.mxu0 %v159
    %226 = vmatprep.subr.mxu0 0.0
    %227 = vmatpush1.msra.mxu0 %v160
    %228 = vmatprep.subr.mxu0 0.0
    %229 = vmatpush1.msra.mxu0 %v161
    %230 = vmatprep.subr.mxu0 0.0
    %231 = vmatpush1.msra.mxu0 %v162
    %232 = vmatprep.subr.mxu0 0.0
    %233 = vmatpush1.msra.mxu0 %v163
    %234 = vmatprep.subr.mxu0 0.0
    %235 = vmatpush1.msra.mxu0 %v164
    %236 = vmatprep.mubr.f32.mxu0 %v132
    %237 = vmatmul.mubr.f32.gmra.mrb[0].mxu0 %v131
    %v238 = vpop.f32.mrb[0].mxu0
    %v239 = vadd.f32 %v170, %v238
    %v240 = vpop.f32.mrb[0].mxu0
    %241 = vdwg.mxu0
    %vm242 = vcmp.gt.f32.partialorder %v239, 0.0
    %v243 = vmul.f32 %v239, 1.442695
    %v244 = vpow.pop %v243
    %v245 = vsub.f32 %v244, 1.0
    %v246 = vsel %vm242, %v239, %v245
    %v247 = vld [vmem:[%s5] sm:$0xff]
    %v248 = vld [vmem:[%s5 + $0x8] sm:$0xff]
    %v249 = vld [vmem:[%s5 + $0x10] sm:$0xff]
    %v250 = vld [vmem:[%s5 + $0x18] sm:$0xff]
    %v251 = vld [vmem:[%s5 + $0x20] sm:$0xff]
    %v252 = vld [vmem:[%s5 + $0x28] sm:$0xff]
    %v253 = vld [vmem:[%s5 + $0x30] sm:$0xff]
    %v254 = vld [vmem:[%s5 + $0x38] sm:$0xff]
    %vm255 = vcmask 523264
    %v257 = vsel %vm255, %v246, 0
    %259 = vmatprep.subr.mxu0 0.0
    %260 = vmatpush1.msra.mxu0 %v247
    %261 = vmatprep.subr.mxu0 0.0
    %262 = vmatpush1.msra.mxu0 %v248
    %263 = vmatprep.subr.mxu0 0.0
    %264 = vmatpush1.msra.mxu0 %v249
    %265 = vmatprep.subr.mxu0 0.0
    %266 = vmatpush1.msra.mxu0 %v250
    %267 = vmatprep.subr.mxu0 0.0
    %268 = vmatpush1.msra.mxu0 %v251
    %269 = vmatprep.subr.mxu0 0.0
    %270 = vmatpush1.msra.mxu0 %v252
    %271 = vmatprep.subr.mxu0 0.0
    %272 = vmatpush1.msra.mxu0 %v253
    %273 = vmatprep.subr.mxu0 0.0
    %274 = vmatpush1.msra.mxu0 %v254
    %275 = vmatprep.subr.mxu0 0.0
    %276 = vmatpush1.msra.mxu0 0.0
    %277 = vmatprep.subr.mxu0 0.0
    %278 = vmatpush1.msra.mxu0 0.0
    %279 = vmatprep.subr.mxu0 0.0
    %280 = vmatpush1.msra.mxu0 0.0
    %281 = vmatprep.subr.mxu0 0.0
    %282 = vmatpush1.msra.mxu0 0.0
    %283 = vmatprep.subr.mxu0 0.0
    %284 = vmatpush1.msra.mxu0 0.0
    %285 = vmatprep.subr.mxu0 0.0
    %286 = vmatpush1.msra.mxu0 0.0
    %287 = vmatprep.subr.mxu0 0.0
    %288 = vmatpush1.msra.mxu0 0.0
    %289 = vmatprep.subr.mxu0 0.0
    %290 = vmatpush1.msra.mxu0 0.0
    %291 = vmatprep.subr.mxu0 0.0
    %292 = vmatpush1.msra.mxu0 0.0
    %293 = vmatprep.subr.mxu0 0.0
    %294 = vmatpush1.msra.mxu0 0.0
    %295 = vmatprep.subr.mxu0 0.0
    %296 = vmatpush1.msra.mxu0 0.0
    %297 = vmatprep.subr.mxu0 0.0
    %298 = vmatpush1.msra.mxu0 0.0
    %299 = vmatprep.subr.mxu0 0.0
    %300 = vmatpush1.msra.mxu0 0.0
    %301 = vmatprep.subr.mxu0 0.0
    %302 = vmatpush1.msra.mxu0 0.0
    %303 = vmatprep.subr.mxu0 0.0
    %304 = vmatpush1.msra.mxu0 0.0
    %305 = vmatprep.subr.mxu0 0.0
    %306 = vmatpush1.msra.mxu0 0.0
    %307 = vmatprep.subr.mxu0 0.0
    %308 = vmatpush1.msra.mxu0 0.0
    %309 = vmatprep.subr.mxu0 0.0
    %310 = vmatpush1.msra.mxu0 0.0
    %311 = vmatprep.subr.mxu0 0.0
    %312 = vmatpush1.msra.mxu0 0.0
    %313 = vmatprep.subr.mxu0 0.0
    %314 = vmatpush1.msra.mxu0 0.0
    %315 = vmatprep.subr.mxu0 0.0
    %316 = vmatpush1.msra.mxu0 0.0
    %317 = vmatprep.subr.mxu0 0.0
    %318 = vmatpush1.msra.mxu0 0.0
    %319 = vmatprep.subr.mxu0 0.0
    %320 = vmatpush1.msra.mxu0 0.0
    %321 = vmatprep.subr.mxu0 0.0
    %322 = vmatpush1.msra.mxu0 0.0
    %323 = vmatprep.mubr.f32.mxu0 0.0
    %324 = vmatmul.mubr.f32.gmra.mrb[0].mxu0 %v257
    %v325 = vpop.f32.mrb[0].mxu0
    %v326 = vadd.f32 0.0, %v325
    %v327 = vpop.f32.mrb[0].mxu0
    %328 = vdwg.mxu0
    %v329 = vld [vmem:[%s6] sm:$0xff]
    %v330 = vld [vmem:[%s6 + $0x8] sm:$0xff]
    %v331 = vld [vmem:[%s6 + $0x10] sm:$0xff]
    %v332 = vld [vmem:[%s6 + $0x18] sm:$0xff]
    %v333 = vld [vmem:[%s6 + $0x20] sm:$0xff]
    %v334 = vld [vmem:[%s6 + $0x28] sm:$0xff]
    %v335 = vld [vmem:[%s6 + $0x30] sm:$0xff]
    %v336 = vld [vmem:[%s6 + $0x38] sm:$0xff]
    %337 = vmatprep.subr.mxu0 0.0
    %338 = vmatpush1.msra.mxu0 %v329
    %339 = vmatprep.subr.mxu0 0.0
    %340 = vmatpush1.msra.mxu0 %v330
    %341 = vmatprep.subr.mxu0 0.0
    %342 = vmatpush1.msra.mxu0 %v331
    %343 = vmatprep.subr.mxu0 0.0
    %344 = vmatpush1.msra.mxu0 %v332
    %345 = vmatprep.subr.mxu0 0.0
    %346 = vmatpush1.msra.mxu0 %v333
    %347 = vmatprep.subr.mxu0 0.0
    %348 = vmatpush1.msra.mxu0 %v334
    %349 = vmatprep.subr.mxu0 0.0
    %350 = vmatpush1.msra.mxu0 %v335
    %351 = vmatprep.subr.mxu0 0.0
    %352 = vmatpush1.msra.mxu0 %v336
    %353 = vmatprep.subr.mxu0 0.0
    %354 = vmatpush1.msra.mxu0 0.0
    %355 = vmatprep.subr.mxu0 0.0
    %356 = vmatpush1.msra.mxu0 0.0
    %357 = vmatprep.subr.mxu0 0.0
    %358 = vmatpush1.msra.mxu0 0.0
    %359 = vmatprep.subr.mxu0 0.0
    %360 = vmatpush1.msra.mxu0 0.0
    %361 = vmatprep.subr.mxu0 0.0
    %362 = vmatpush1.msra.mxu0 0.0
    %363 = vmatprep.subr.mxu0 0.0
    %364 = vmatpush1.msra.mxu0 0.0
    %365 = vmatprep.subr.mxu0 0.0
    %366 = vmatpush1.msra.mxu0 0.0
    %367 = vmatprep.subr.mxu0 0.0
    %368 = vmatpush1.msra.mxu0 0.0
    %369 = vmatprep.subr.mxu0 0.0
    %370 = vmatpush1.msra.mxu0 0.0
    %371 = vmatprep.subr.mxu0 0.0
    %372 = vmatpush1.msra.mxu0 0.0
    %373 = vmatprep.subr.mxu0 0.0
    %374 = vmatpush1.msra.mxu0 0.0
    %375 = vmatprep.subr.mxu0 0.0
    %376 = vmatpush1.msra.mxu0 0.0
    %377 = vmatprep.subr.mxu0 0.0
    %378 = vmatpush1.msra.mxu0 0.0
    %379 = vmatprep.subr.mxu0 0.0
    %380 = vmatpush1.msra.mxu0 0.0
    %381 = vmatprep.subr.mxu0 0.0
    %382 = vmatpush1.msra.mxu0 0.0
    %383 = vmatprep.subr.mxu0 0.0
    %384 = vmatpush1.msra.mxu0 0.0
    %385 = vmatprep.subr.mxu0 0.0
    %386 = vmatpush1.msra.mxu0 0.0
    %387 = vmatprep.subr.mxu0 0.0
    %388 = vmatpush1.msra.mxu0 0.0
    %389 = vmatprep.subr.mxu0 0.0
    %390 = vmatpush1.msra.mxu0 0.0
    %391 = vmatprep.subr.mxu0 0.0
    %392 = vmatpush1.msra.mxu0 0.0
    %393 = vmatprep.subr.mxu0 0.0
    %394 = vmatpush1.msra.mxu0 0.0
    %395 = vmatprep.subr.mxu0 0.0
    %396 = vmatpush1.msra.mxu0 0.0
    %397 = vmatprep.subr.mxu0 0.0
    %398 = vmatpush1.msra.mxu0 0.0
    %399 = vmatprep.subr.mxu0 0.0
    %400 = vmatpush1.msra.mxu0 0.0
    %401 = vmatprep.mubr.f32.mxu0 0.0
    %402 = vmatmul.mubr.f32.gmra.mrb[0].mxu0 %v257
    %v403 = vpop.f32.mrb[0].mxu0
    %v404 = vadd.f32 0.0, %v403
    %v405 = vpop.f32.mrb[0].mxu0
    %406 = vdwg.mxu0
    %v407 = vand.u32 2147483647, %v404
    %v408 = vadd.f32 %v407, 1.0
    %v409 = vrcp.pop %v408
    %v410 = vmul.f32 %v326, %v409
    %411 = vst.msk [vmem:[#allocation2] sm:$0xff] %vm48, %v410
    // Predicated region
    $region30: #{tpu_custom_call.1} parent=1 // pred_check
      _
    $region31: #{tpu_custom_call.1} parent=1 // pred_check_branch
      %413 = sbr.rel (0) target = $region33
    $region32: #{tpu_custom_call.1} parent=1 // pred_region
      %s415 = ssub.s32 128, 128
      %416 = vsyncadd [#allocation3], %s415
      %s418 = sshll.u32 [#allocation2], 4
      %s419 = int_to_ptr.vmem [resolvable:$true] %s418
      %421 = dma.vmem_to_hbm [thread:$0]  %s419, 128, %s7, [#allocation3]
    $region33: #{tpu_custom_call.1} parent=1 // pred_fallthru
      _
    // Predicated region
    $region34: #{tpu_custom_call.1} parent=1 // pred_check
      _
    $region35: #{tpu_custom_call.1} parent=1 // pred_check_branch
      %423 = sbr.rel (0) target = $region37
    $region36: #{tpu_custom_call.1} parent=1 // pred_region
      %424 = dma.done [#allocation3], 128
    $region37: #{tpu_custom_call.1} parent=1 // pred_fallthru
      _
    %425 = vsyncpa [#allocation3], 1

</llo_original>
